<compile_context>
chip_gen: v7x
topology: tpu7x:2x2x1
jax: 0.10.0
libtpu: 0.0.40
codegen_flags: <defaults>
</compile_context>

<pallas_src>
import jax
import jax.numpy as jnp
from jax import lax
from jax.experimental import pallas as pl
from jax.experimental.pallas import tpu as pltpu

H = W = 28          # fixed by the module (fc expects 1*28*28 features)
KH = KW = 3
NUM_CLASSES = 10
FEATURES = H * W    # 784


def cnn_matmul_kernel(x_ref, w_ref, out_ref):
    """One batch tile of the fused (conv∘fc) matmul.

      x_ref   : (nt, 784)  VMEM  flattened input tile (batch on sublanes)
      w_ref   : (784, 10)  VMEM  composed conv+fc weight (transposed)
      out_ref : (nt, 10)   VMEM  logits for this tile
    """
    out_ref[...] = jnp.dot(x_ref[...], w_ref[...],
                           preferred_element_type=jnp.float32)


def _compose_weights(conv_w, fc_w):
    """Fold conv1 (3x3, pad=1, no bias) into fc (no bias).

    Returns W_eff_T of shape (784, 10) with
      out[n, c] = sum_{p} x_flat[n, p] * W_eff_T[p, c]
    exactly equal to fc(flatten(conv1(x))).
    """
    # out[c] = sum_{h,w} fc_w[c,h,w] * conv(x)[h,w]
    #        = sum_{h',w'} x[h',w'] * sum_{di,dj} conv_w[di,dj] * fc_w[c, h'-di+1, w'-dj+1]
    # which is a pad=1 correlation of the fc weight image with the FLIPPED conv kernel.
    fc_img = fc_w.reshape(NUM_CLASSES, 1, H, W).astype(jnp.float32)   # (10,1,28,28)
    k = jnp.flip(conv_w.astype(jnp.float32), axis=(-2, -1))            # (1,1,3,3)
    w_eff = lax.conv_general_dilated(
        fc_img, k, window_strides=(1, 1), padding=((1, 1), (1, 1)),
        dimension_numbers=("NCHW", "OIHW", "NCHW"))                    # (10,1,28,28)
    return w_eff.reshape(NUM_CLASSES, FEATURES).T                      # (784, 10)


def cnn_forward(x_nchw, conv_w, fc_w, *, batch_tile=512):
    """Pallas forward pass of the CNN module.

    x_nchw : (N, 1, 28, 28) float32
    conv_w : (1, 1, 3, 3)   float32   (PyTorch Conv2d weight layout)
    fc_w   : (10, 784)      float32   (PyTorch Linear weight layout)
    returns: (N, 10)        float32
    """
    n = x_nchw.shape[0]

    # Free reshape (row-major contiguous) -- no HBM relayout of activations.
    x_flat = x_nchw.reshape(n, FEATURES).astype(jnp.float32)           # (N, 784)

    # Tiny (784 x 10) composed weight, computed once on the host side.
    w_eff_t = _compose_weights(conv_w, fc_w)                           # (784, 10)

    if n <= batch_tile:
        # Single full block: 784 lanes stay dense even for tiny batches.
        nt = n
        n_pad = n
    else:
        nt = max(8, (batch_tile // 8) * 8)                             # sublane-aligned
        n_pad = ((n + nt - 1) // nt) * nt
        if n_pad != n:
            x_flat = jnp.pad(x_flat, ((0, n_pad - n), (0, 0)))

    cost = pl.CostEstimate(
        flops=2 * int(n_pad) * FEATURES * NUM_CLASSES,
        transcendentals=0,
        bytes_accessed=(int(n_pad) * FEATURES * 4        # input
                        + FEATURES * NUM_CLASSES * 4     # composed weight
                        + int(n_pad) * NUM_CLASSES * 4), # output
    )

    out = pl.pallas_call(
        cnn_matmul_kernel,
        out_shape=jax.ShapeDtypeStruct((n_pad, NUM_CLASSES), jnp.float32),
        grid=(n_pad // nt,),
        in_specs=[
            pl.BlockSpec((nt, FEATURES), lambda i: (i, 0)),            # input tile
            pl.BlockSpec((FEATURES, NUM_CLASSES), lambda i: (0, 0)),   # composed weight
        ],
        out_specs=pl.BlockSpec((nt, NUM_CLASSES), lambda i: (i, 0)),
        compiler_params=pltpu.CompilerParams(
            dimension_semantics=("parallel",)),
        cost_estimate=cost,
    )(x_flat, w_eff_t)

    return out[:n]                                                     # (N, 10)


def reference_forward(x_nchw, conv_w, fc_w):
    """Pure-JAX reference matching PyTorch semantics (conv -> flatten -> fc)."""
    y = lax.conv_general_dilated(
        x_nchw, conv_w, window_strides=(1, 1), padding=((1, 1), (1, 1)),
        dimension_numbers=("NCHW", "OIHW", "NCHW"))
    y = y.reshape(-1, FEATURES)
    return y @ fc_w.T


if __name__ == "__main__":
    key = jax.random.PRNGKey(0)
    kx, kc, kf = jax.random.split(key, 3)

    batch = 2
    x = jax.random.normal(kx, (batch, 1, H, W), dtype=jnp.float32)
    conv_w = jax.random.normal(kc, (1, 1, KH, KW), dtype=jnp.float32) * 0.1
    fc_w = jax.random.normal(kf, (NUM_CLASSES, FEATURES), dtype=jnp.float32) * 0.05

    out = jax.block_until_ready(cnn_forward(x, conv_w, fc_w))
    ref = reference_forward(x, conv_w, fc_w)
    assert out.shape == (batch, NUM_CLASSES)
    assert jnp.allclose(out, ref, atol=1e-3, rtol=1e-3), "mismatch vs reference (small batch)"

    # Exercise the gridded / batch-padded multi-tile path as well.
    batch2 = 300
    x2 = jax.random.normal(kx, (batch2, 1, H, W), dtype=jnp.float32)
    out2 = jax.block_until_ready(cnn_forward(x2, conv_w, fc_w, batch_tile=128))
    ref2 = reference_forward(x2, conv_w, fc_w)
    assert out2.shape == (batch2, NUM_CLASSES)
    assert jnp.allclose(out2, ref2, atol=1e-3, rtol=1e-3), "mismatch vs reference (tiled batch)"

    print("KERNEL_OK")
</pallas_src>

<mosaic_0001>
module attributes {stable_mosaic.version = 11 : i64} {
  func.func @cnn_matmul_kernel(%arg0: i32, %arg1: memref<2x784xf32, #tpu.memory_space<vmem>>, %arg2: memref<784x10xf32, #tpu.memory_space<vmem>>, %arg3: memref<2x10xf32, #tpu.memory_space<vmem>>) attributes {dimension_semantics = [#tpu.dimension_semantics<parallel>], iteration_bounds = array<i64: 1>, scalar_prefetch = 0 : i64, scratch_operands = 0 : i64, tpu.core_type = #tpu.core_type<tc>, window_params = [{transform_indices = @transform_0, window_bounds = array<i64: 2, 784>}, {pipeline_mode = #tpu.pipeline_mode<synchronous>, transform_indices = @transform_1, window_bounds = array<i64: 784, 10>}, {transform_indices = @transform_2, window_bounds = array<i64: 2, 10>}]} {
    %c0 = arith.constant 0 : index
    %c0_0 = arith.constant 0 : index
    %0 = vector.load %arg1[%c0, %c0_0] : memref<2x784xf32, #tpu.memory_space<vmem>>, vector<2x784xf32>
    %c0_1 = arith.constant 0 : index
    %c0_2 = arith.constant 0 : index
    %1 = vector.load %arg2[%c0_1, %c0_2] : memref<784x10xf32, #tpu.memory_space<vmem>>, vector<784x10xf32>
    %cst = arith.constant dense<0.000000e+00> : vector<2x10xf32>
    %2 = tpu.matmul %0, %1, %cst {dimension_numbers = #tpu.dot_dimension_numbers<[1], [0], [0], [1], [0, 0, 1, 1], [], []>} : vector<2x784xf32>, vector<784x10xf32>, vector<2x10xf32> -> vector<2x10xf32>
    %c0_3 = arith.constant 0 : index
    %c0_4 = arith.constant 0 : index
    %3 = vector.load %arg3[%c0_3, %c0_4] : memref<2x10xf32, #tpu.memory_space<vmem>>, vector<2x10xf32>
    tpu.vector_store %arg3[%c0_3, %c0_4], %2 {strides = array<i32>} : memref<2x10xf32, #tpu.memory_space<vmem>>, vector<2x10xf32>,
    return
  }
  func.func @transform_0(%arg0: i32) -> (i32, i32) {
    %c0_i32 = arith.constant 0 : i32
    %c0_i32_0 = arith.constant 0 : i32
    return %arg0, %c0_i32 : i32, i32
  }
  func.func @transform_1(%arg0: i32) -> (i32, i32) {
    %c0_i32 = arith.constant 0 : i32
    %c0_i32_0 = arith.constant 0 : i32
    %c0_i32_1 = arith.constant 0 : i32
    return %c0_i32, %c0_i32_0 : i32, i32
  }
  func.func @transform_2(%arg0: i32) -> (i32, i32) {
    %c0_i32 = arith.constant 0 : i32
    %c0_i32_0 = arith.constant 0 : i32
    return %arg0, %c0_i32 : i32, i32
  }
}

</mosaic_0001>

<llo_original>
// kernel: tpu_custom_call.1
$region0: #{tpu_custom_call.1}
  #allocation0 [shape = 'u32[]', space=smem, size = 0x4, offset = 0x4, fixed_abs, tag = 'smem constant byte address 0x4 - core index']
  #allocation1 [shape = 'u32[144,128]{1,0:T(1,128)}', space=vmem, size = 0x12000, scoped, tag = 'internal scratch']
  %s0 = inlined_call_operand.vmem [shape: f32[2,784], index: 0, kind: input, shape index: {}]
  %s1 = inlined_call_operand.vmem [shape: f32[784,10], index: 1, kind: input, shape index: {}]
  %s2 = inlined_call_operand.hbm [shape: f32[2,10], index: 2, kind: output, shape index: {}]
  %s3 = sld [smem:[#allocation0]]
  $region18: #{tpu_custom_call.1} parent=0
    _
  %s5 = ssub.s32 1, %s3
  %s6 = scalar_select 0, %s5, %s3
  $region1: #{tpu_custom_call.1} parent=0
    #allocation2 [shape = 'u8[1024]{0}', space=vmem, size = 0x400, scoped, tag = 'output window, operand 0, single buffered']
    #allocation3 [shape = 's32[1]{0}', space=sflag, size = 0x4, scoped, tag = 'scoped memory for tpu_custom_call.1']
    %7 = vsyncpa [#allocation3], 0
    // Predicated region
    $region2: #{tpu_custom_call.1} parent=1 // pred_check
      _
    $region3: #{tpu_custom_call.1} parent=1 // pred_check_branch
      %9 = sbr.rel (0) target = $region5
    $region4: #{tpu_custom_call.1} parent=1 // pred_region
      _
    $region5: #{tpu_custom_call.1} parent=1 // pred_fallthru
      _
    // Predicated region
    $region6: #{tpu_custom_call.1} parent=1 // pred_check
      _
    $region7: #{tpu_custom_call.1} parent=1 // pred_check_branch
      %11 = sbr.rel (0) target = $region9
    $region8: #{tpu_custom_call.1} parent=1 // pred_region
      _
    $region9: #{tpu_custom_call.1} parent=1 // pred_fallthru
      _
    %v12 = vld [vmem:[%s0] sm:$0xff]
    %v13 = vld [vmem:[%s0 + $0x8] sm:$0x3f]
    %v14 = vld [vmem:[%s1] sm:$0xff]
    %v15 = vld [vmem:[%s1 + $0x8] sm:$0xff]
    %v16 = vld [vmem:[%s1 + $0x10] sm:$0xff]
    %v17 = vld [vmem:[%s1 + $0x18] sm:$0xff]
    %v18 = vld [vmem:[%s1 + $0x20] sm:$0xff]
    %v19 = vld [vmem:[%s1 + $0x28] sm:$0xff]
    %v20 = vld [vmem:[%s1 + $0x30] sm:$0xff]
    %v21 = vld [vmem:[%s1 + $0x38] sm:$0xff]
    %v22 = vld [vmem:[%s1 + $0x40] sm:$0xff]
    %v23 = vld [vmem:[%s1 + $0x48] sm:$0xff]
    %v24 = vld [vmem:[%s1 + $0x50] sm:$0xff]
    %v25 = vld [vmem:[%s1 + $0x58] sm:$0xff]
    %v26 = vld [vmem:[%s1 + $0x60] sm:$0xff]
    %v27 = vld [vmem:[%s1 + $0x68] sm:$0xff]
    %v28 = vld [vmem:[%s1 + $0x70] sm:$0xff]
    %v29 = vld [vmem:[%s1 + $0x78] sm:$0xff]
    %v30 = vld [vmem:[%s1 + $0x80] sm:$0xff]
    %v31 = vld [vmem:[%s1 + $0x88] sm:$0xff]
    %v32 = vld [vmem:[%s1 + $0x90] sm:$0xff]
    %v33 = vld [vmem:[%s1 + $0x98] sm:$0xff]
    %v34 = vld [vmem:[%s1 + $0xa0] sm:$0xff]
    %v35 = vld [vmem:[%s1 + $0xa8] sm:$0xff]
    %v36 = vld [vmem:[%s1 + $0xb0] sm:$0xff]
    %v37 = vld [vmem:[%s1 + $0xb8] sm:$0xff]
    %v38 = vld [vmem:[%s1 + $0xc0] sm:$0xff]
    %v39 = vld [vmem:[%s1 + $0xc8] sm:$0xff]
    %v40 = vld [vmem:[%s1 + $0xd0] sm:$0xff]
    %v41 = vld [vmem:[%s1 + $0xd8] sm:$0xff]
    %v42 = vld [vmem:[%s1 + $0xe0] sm:$0xff]
    %v43 = vld [vmem:[%s1 + $0xe8] sm:$0xff]
    %v44 = vld [vmem:[%s1 + $0xf0] sm:$0xff]
    %v45 = vld [vmem:[%s1 + $0xf8] sm:$0xff]
    %v46 = vld [vmem:[%s1 + $0x100] sm:$0xff]
    %v47 = vld [vmem:[%s1 + $0x108] sm:$0xff]
    %v48 = vld [vmem:[%s1 + $0x110] sm:$0xff]
    %v49 = vld [vmem:[%s1 + $0x118] sm:$0xff]
    %v50 = vld [vmem:[%s1 + $0x120] sm:$0xff]
    %v51 = vld [vmem:[%s1 + $0x128] sm:$0xff]
    %v52 = vld [vmem:[%s1 + $0x130] sm:$0xff]
    %v53 = vld [vmem:[%s1 + $0x138] sm:$0xff]
    %v54 = vld [vmem:[%s1 + $0x140] sm:$0xff]
    %v55 = vld [vmem:[%s1 + $0x148] sm:$0xff]
    %v56 = vld [vmem:[%s1 + $0x150] sm:$0xff]
    %v57 = vld [vmem:[%s1 + $0x158] sm:$0xff]
    %v58 = vld [vmem:[%s1 + $0x160] sm:$0xff]
    %v59 = vld [vmem:[%s1 + $0x168] sm:$0xff]
    %v60 = vld [vmem:[%s1 + $0x170] sm:$0xff]
    %v61 = vld [vmem:[%s1 + $0x178] sm:$0xff]
    %v62 = vld [vmem:[%s1 + $0x180] sm:$0xff]
    %v63 = vld [vmem:[%s1 + $0x188] sm:$0xff]
    %v64 = vld [vmem:[%s1 + $0x190] sm:$0xff]
    %v65 = vld [vmem:[%s1 + $0x198] sm:$0xff]
    %v66 = vld [vmem:[%s1 + $0x1a0] sm:$0xff]
    %v67 = vld [vmem:[%s1 + $0x1a8] sm:$0xff]
    %v68 = vld [vmem:[%s1 + $0x1b0] sm:$0xff]
    %v69 = vld [vmem:[%s1 + $0x1b8] sm:$0xff]
    %v70 = vld [vmem:[%s1 + $0x1c0] sm:$0xff]
    %v71 = vld [vmem:[%s1 + $0x1c8] sm:$0xff]
    %v72 = vld [vmem:[%s1 + $0x1d0] sm:$0xff]
    %v73 = vld [vmem:[%s1 + $0x1d8] sm:$0xff]
    %v74 = vld [vmem:[%s1 + $0x1e0] sm:$0xff]
    %v75 = vld [vmem:[%s1 + $0x1e8] sm:$0xff]
    %v76 = vld [vmem:[%s1 + $0x1f0] sm:$0xff]
    %v77 = vld [vmem:[%s1 + $0x1f8] sm:$0xff]
    %v78 = vld [vmem:[%s1 + $0x200] sm:$0xff]
    %v79 = vld [vmem:[%s1 + $0x208] sm:$0xff]
    %v80 = vld [vmem:[%s1 + $0x210] sm:$0xff]
    %v81 = vld [vmem:[%s1 + $0x218] sm:$0xff]
    %v82 = vld [vmem:[%s1 + $0x220] sm:$0xff]
    %v83 = vld [vmem:[%s1 + $0x228] sm:$0xff]
    %v84 = vld [vmem:[%s1 + $0x230] sm:$0xff]
    %v85 = vld [vmem:[%s1 + $0x238] sm:$0xff]
    %v86 = vld [vmem:[%s1 + $0x240] sm:$0xff]
    %v87 = vld [vmem:[%s1 + $0x248] sm:$0xff]
    %v88 = vld [vmem:[%s1 + $0x250] sm:$0xff]
    %v89 = vld [vmem:[%s1 + $0x258] sm:$0xff]
    %v90 = vld [vmem:[%s1 + $0x260] sm:$0xff]
    %v91 = vld [vmem:[%s1 + $0x268] sm:$0xff]
    %v92 = vld [vmem:[%s1 + $0x270] sm:$0xff]
    %v93 = vld [vmem:[%s1 + $0x278] sm:$0xff]
    %v94 = vld [vmem:[%s1 + $0x280] sm:$0xff]
    %v95 = vld [vmem:[%s1 + $0x288] sm:$0xff]
    %v96 = vld [vmem:[%s1 + $0x290] sm:$0xff]
    %v97 = vld [vmem:[%s1 + $0x298] sm:$0xff]
    %v98 = vld [vmem:[%s1 + $0x2a0] sm:$0xff]
    %v99 = vld [vmem:[%s1 + $0x2a8] sm:$0xff]
    %v100 = vld [vmem:[%s1 + $0x2b0] sm:$0xff]
    %v101 = vld [vmem:[%s1 + $0x2b8] sm:$0xff]
    %v102 = vld [vmem:[%s1 + $0x2c0] sm:$0xff]
    %v103 = vld [vmem:[%s1 + $0x2c8] sm:$0xff]
    %v104 = vld [vmem:[%s1 + $0x2d0] sm:$0xff]
    %v105 = vld [vmem:[%s1 + $0x2d8] sm:$0xff]
    %v106 = vld [vmem:[%s1 + $0x2e0] sm:$0xff]
    %v107 = vld [vmem:[%s1 + $0x2e8] sm:$0xff]
    %v108 = vld [vmem:[%s1 + $0x2f0] sm:$0xff]
    %v109 = vld [vmem:[%s1 + $0x2f8] sm:$0xff]
    %v110 = vld [vmem:[%s1 + $0x300] sm:$0xff]
    %v111 = vld [vmem:[%s1 + $0x308] sm:$0xff]
    %v114 = vcombine.high %v12, %v12
    %v116 = vunpack.c.l.s4 1983009808
    %v117 = vunpack.c.0.s8 %v116
    %v118 = vlaneseq
    %v119 = vshrl.u32 %v118, 7
    %v120 = vsub.s32 %v117, %v119
    %v121 = vrot.slane %v12, %v120
    %v123 = vunpack.c.l.s4 1983009808
    %v124 = vunpack.c.0.s8 %v123
    %v125 = vlaneseq
    %v126 = vshrl.u32 %v125, 7
    %v127 = vsub.s32 %v124, %v126
    %v128 = vrot.slane %v114, %v127
    %v129 = vcombine.high %v121, %v121
    %v130 = vcombine.high %v128, %v128
    %v131 = vcombine.high %v13, %v13
    %v133 = vunpack.c.l.s4 1983009808
    %v134 = vunpack.c.0.s8 %v133
    %v135 = vlaneseq
    %v136 = vshrl.u32 %v135, 7
    %v137 = vsub.s32 %v134, %v136
    %v138 = vrot.slane %v13, %v137
    %v140 = vunpack.c.l.s4 1983009808
    %v141 = vunpack.c.0.s8 %v140
    %v142 = vlaneseq
    %v143 = vshrl.u32 %v142, 7
    %v144 = vsub.s32 %v141, %v143
    %v145 = vrot.slane %v131, %v144
    %v146 = vcombine.high %v138, %v138
    %vm153 = vcmask 130048
    %v154 = vsel %vm153, %v145, 0
    %156 = vmatprep.subr.mxu0 0.0
    %157 = vmatpush1.msra.mxu0 %v14
    %158 = vmatprep.subr.mxu0 0.0
    %159 = vmatpush1.msra.mxu0 %v15
    %160 = vmatprep.subr.mxu0 0.0
    %161 = vmatpush1.msra.mxu0 %v16
    %162 = vmatprep.subr.mxu0 0.0
    %163 = vmatpush1.msra.mxu0 %v17
    %164 = vmatprep.subr.mxu0 0.0
    %165 = vmatpush1.msra.mxu0 %v18
    %166 = vmatprep.subr.mxu0 0.0
    %167 = vmatpush1.msra.mxu0 %v19
    %168 = vmatprep.subr.mxu0 0.0
    %169 = vmatpush1.msra.mxu0 %v20
    %170 = vmatprep.subr.mxu0 0.0
    %171 = vmatpush1.msra.mxu0 %v21
    %172 = vmatprep.subr.mxu0 0.0
    %173 = vmatpush1.msra.mxu0 %v22
    %174 = vmatprep.subr.mxu0 0.0
    %175 = vmatpush1.msra.mxu0 %v23
    %176 = vmatprep.subr.mxu0 0.0
    %177 = vmatpush1.msra.mxu0 %v24
    %178 = vmatprep.subr.mxu0 0.0
    %179 = vmatpush1.msra.mxu0 %v25
    %180 = vmatprep.subr.mxu0 0.0
    %181 = vmatpush1.msra.mxu0 %v26
    %182 = vmatprep.subr.mxu0 0.0
    %183 = vmatpush1.msra.mxu0 %v27
    %184 = vmatprep.subr.mxu0 0.0
    %185 = vmatpush1.msra.mxu0 %v28
    %186 = vmatprep.subr.mxu0 0.0
    %187 = vmatpush1.msra.mxu0 %v29
    %188 = vmatprep.subr.mxu0 0.0
    %189 = vmatpush1.msra.mxu0 %v30
    %190 = vmatprep.subr.mxu0 0.0
    %191 = vmatpush1.msra.mxu0 %v31
    %192 = vmatprep.subr.mxu0 0.0
    %193 = vmatpush1.msra.mxu0 %v32
    %194 = vmatprep.subr.mxu0 0.0
    %195 = vmatpush1.msra.mxu0 %v33
    %196 = vmatprep.subr.mxu0 0.0
    %197 = vmatpush1.msra.mxu0 %v34
    %198 = vmatprep.subr.mxu0 0.0
    %199 = vmatpush1.msra.mxu0 %v35
    %200 = vmatprep.subr.mxu0 0.0
    %201 = vmatpush1.msra.mxu0 %v36
    %202 = vmatprep.subr.mxu0 0.0
    %203 = vmatpush1.msra.mxu0 %v37
    %204 = vmatprep.subr.mxu0 0.0
    %205 = vmatpush1.msra.mxu0 %v38
    %206 = vmatprep.subr.mxu0 0.0
    %207 = vmatpush1.msra.mxu0 %v39
    %208 = vmatprep.subr.mxu0 0.0
    %209 = vmatpush1.msra.mxu0 %v40
    %210 = vmatprep.subr.mxu0 0.0
    %211 = vmatpush1.msra.mxu0 %v41
    %212 = vmatprep.subr.mxu0 0.0
    %213 = vmatpush1.msra.mxu0 %v42
    %214 = vmatprep.subr.mxu0 0.0
    %215 = vmatpush1.msra.mxu0 %v43
    %216 = vmatprep.subr.mxu0 0.0
    %217 = vmatpush1.msra.mxu0 %v44
    %218 = vmatprep.subr.mxu0 0.0
    %219 = vmatpush1.msra.mxu0 %v45
    %220 = vmatprep.mubr.f32.mxu0 %v129
    %221 = vmatmul.mubr.f32.gmra.mrb[0].mxu0 %v121
    %v222 = vpop.f32.mrb[0].mxu0
    %v223 = vadd.f32 0.0, %v222
    %v224 = vpop.f32.mrb[0].mxu0
    %225 = vdwg.mxu0
    %226 = vmatprep.subr.mxu0 0.0
    %227 = vmatpush1.msra.mxu0 %v46
    %228 = vmatprep.subr.mxu0 0.0
    %229 = vmatpush1.msra.mxu0 %v47
    %230 = vmatprep.subr.mxu0 0.0
    %231 = vmatpush1.msra.mxu0 %v48
    %232 = vmatprep.subr.mxu0 0.0
    %233 = vmatpush1.msra.mxu0 %v49
    %234 = vmatprep.subr.mxu0 0.0
    %235 = vmatpush1.msra.mxu0 %v50
    %236 = vmatprep.subr.mxu0 0.0
    %237 = vmatpush1.msra.mxu0 %v51
    %238 = vmatprep.subr.mxu0 0.0
    %239 = vmatpush1.msra.mxu0 %v52
    %240 = vmatprep.subr.mxu0 0.0
    %241 = vmatpush1.msra.mxu0 %v53
    %242 = vmatprep.subr.mxu0 0.0
    %243 = vmatpush1.msra.mxu0 %v54
    %244 = vmatprep.subr.mxu0 0.0
    %245 = vmatpush1.msra.mxu0 %v55
    %246 = vmatprep.subr.mxu0 0.0
    %247 = vmatpush1.msra.mxu0 %v56
    %248 = vmatprep.subr.mxu0 0.0
    %249 = vmatpush1.msra.mxu0 %v57
    %250 = vmatprep.subr.mxu0 0.0
    %251 = vmatpush1.msra.mxu0 %v58
    %252 = vmatprep.subr.mxu0 0.0
    %253 = vmatpush1.msra.mxu0 %v59
    %254 = vmatprep.subr.mxu0 0.0
    %255 = vmatpush1.msra.mxu0 %v60
    %256 = vmatprep.subr.mxu0 0.0
    %257 = vmatpush1.msra.mxu0 %v61
    %258 = vmatprep.subr.mxu0 0.0
    %259 = vmatpush1.msra.mxu0 %v62
    %260 = vmatprep.subr.mxu0 0.0
    %261 = vmatpush1.msra.mxu0 %v63
    %262 = vmatprep.subr.mxu0 0.0
    %263 = vmatpush1.msra.mxu0 %v64
    %264 = vmatprep.subr.mxu0 0.0
    %265 = vmatpush1.msra.mxu0 %v65
    %266 = vmatprep.subr.mxu0 0.0
    %267 = vmatpush1.msra.mxu0 %v66
    %268 = vmatprep.subr.mxu0 0.0
    %269 = vmatpush1.msra.mxu0 %v67
    %270 = vmatprep.subr.mxu0 0.0
    %271 = vmatpush1.msra.mxu0 %v68
    %272 = vmatprep.subr.mxu0 0.0
    %273 = vmatpush1.msra.mxu0 %v69
    %274 = vmatprep.subr.mxu0 0.0
    %275 = vmatpush1.msra.mxu0 %v70
    %276 = vmatprep.subr.mxu0 0.0
    %277 = vmatpush1.msra.mxu0 %v71
    %278 = vmatprep.subr.mxu0 0.0
    %279 = vmatpush1.msra.mxu0 %v72
    %280 = vmatprep.subr.mxu0 0.0
    %281 = vmatpush1.msra.mxu0 %v73
    %282 = vmatprep.subr.mxu0 0.0
    %283 = vmatpush1.msra.mxu0 %v74
    %284 = vmatprep.subr.mxu0 0.0
    %285 = vmatpush1.msra.mxu0 %v75
    %286 = vmatprep.subr.mxu0 0.0
    %287 = vmatpush1.msra.mxu0 %v76
    %288 = vmatprep.subr.mxu0 0.0
    %289 = vmatpush1.msra.mxu0 %v77
    %290 = vmatprep.mubr.f32.mxu0 %v130
    %291 = vmatmul.mubr.f32.gmra.mrb[0].mxu0 %v128
    %v292 = vpop.f32.mrb[0].mxu0
    %v293 = vadd.f32 %v223, %v292
    %v294 = vpop.f32.mrb[0].mxu0
    %295 = vdwg.mxu0
    %296 = vmatprep.subr.mxu0 0.0
    %297 = vmatpush1.msra.mxu0 %v78
    %298 = vmatprep.subr.mxu0 0.0
    %299 = vmatpush1.msra.mxu0 %v79
    %300 = vmatprep.subr.mxu0 0.0
    %301 = vmatpush1.msra.mxu0 %v80
    %302 = vmatprep.subr.mxu0 0.0
    %303 = vmatpush1.msra.mxu0 %v81
    %304 = vmatprep.subr.mxu0 0.0
    %305 = vmatpush1.msra.mxu0 %v82
    %306 = vmatprep.subr.mxu0 0.0
    %307 = vmatpush1.msra.mxu0 %v83
    %308 = vmatprep.subr.mxu0 0.0
    %309 = vmatpush1.msra.mxu0 %v84
    %310 = vmatprep.subr.mxu0 0.0
    %311 = vmatpush1.msra.mxu0 %v85
    %312 = vmatprep.subr.mxu0 0.0
    %313 = vmatpush1.msra.mxu0 %v86
    %314 = vmatprep.subr.mxu0 0.0
    %315 = vmatpush1.msra.mxu0 %v87
    %316 = vmatprep.subr.mxu0 0.0
    %317 = vmatpush1.msra.mxu0 %v88
    %318 = vmatprep.subr.mxu0 0.0
    %319 = vmatpush1.msra.mxu0 %v89
    %320 = vmatprep.subr.mxu0 0.0
    %321 = vmatpush1.msra.mxu0 %v90
    %322 = vmatprep.subr.mxu0 0.0
    %323 = vmatpush1.msra.mxu0 %v91
    %324 = vmatprep.subr.mxu0 0.0
    %325 = vmatpush1.msra.mxu0 %v92
    %326 = vmatprep.subr.mxu0 0.0
    %327 = vmatpush1.msra.mxu0 %v93
    %328 = vmatprep.subr.mxu0 0.0
    %329 = vmatpush1.msra.mxu0 %v94
    %330 = vmatprep.subr.mxu0 0.0
    %331 = vmatpush1.msra.mxu0 %v95
    %332 = vmatprep.subr.mxu0 0.0
    %333 = vmatpush1.msra.mxu0 %v96
    %334 = vmatprep.subr.mxu0 0.0
    %335 = vmatpush1.msra.mxu0 %v97
    %336 = vmatprep.subr.mxu0 0.0
    %337 = vmatpush1.msra.mxu0 %v98
    %338 = vmatprep.subr.mxu0 0.0
    %339 = vmatpush1.msra.mxu0 %v99
    %340 = vmatprep.subr.mxu0 0.0
    %341 = vmatpush1.msra.mxu0 %v100
    %342 = vmatprep.subr.mxu0 0.0
    %343 = vmatpush1.msra.mxu0 %v101
    %344 = vmatprep.subr.mxu0 0.0
    %345 = vmatpush1.msra.mxu0 %v102
    %346 = vmatprep.subr.mxu0 0.0
    %347 = vmatpush1.msra.mxu0 %v103
    %348 = vmatprep.subr.mxu0 0.0
    %349 = vmatpush1.msra.mxu0 %v104
    %350 = vmatprep.subr.mxu0 0.0
    %351 = vmatpush1.msra.mxu0 %v105
    %352 = vmatprep.subr.mxu0 0.0
    %353 = vmatpush1.msra.mxu0 %v106
    %354 = vmatprep.subr.mxu0 0.0
    %355 = vmatpush1.msra.mxu0 %v107
    %356 = vmatprep.subr.mxu0 0.0
    %357 = vmatpush1.msra.mxu0 %v108
    %358 = vmatprep.subr.mxu0 0.0
    %359 = vmatpush1.msra.mxu0 %v109
    %360 = vmatprep.mubr.f32.mxu0 %v146
    %361 = vmatmul.mubr.f32.gmra.mrb[0].mxu0 %v138
    %v362 = vpop.f32.mrb[0].mxu0
    %v363 = vadd.f32 %v293, %v362
    %v364 = vpop.f32.mrb[0].mxu0
    %365 = vdwg.mxu0
    %366 = vmatprep.subr.mxu0 0.0
    %367 = vmatpush1.msra.mxu0 %v110
    %368 = vmatprep.subr.mxu0 0.0
    %369 = vmatpush1.msra.mxu0 %v111
    %370 = vmatprep.subr.mxu0 0.0
    %371 = vmatpush1.msra.mxu0 0.0
    %372 = vmatprep.subr.mxu0 0.0
    %373 = vmatpush1.msra.mxu0 0.0
    %374 = vmatprep.subr.mxu0 0.0
    %375 = vmatpush1.msra.mxu0 0.0
    %376 = vmatprep.subr.mxu0 0.0
    %377 = vmatpush1.msra.mxu0 0.0
    %378 = vmatprep.subr.mxu0 0.0
    %379 = vmatpush1.msra.mxu0 0.0
    %380 = vmatprep.subr.mxu0 0.0
    %381 = vmatpush1.msra.mxu0 0.0
    %382 = vmatprep.subr.mxu0 0.0
    %383 = vmatpush1.msra.mxu0 0.0
    %384 = vmatprep.subr.mxu0 0.0
    %385 = vmatpush1.msra.mxu0 0.0
    %386 = vmatprep.subr.mxu0 0.0
    %387 = vmatpush1.msra.mxu0 0.0
    %388 = vmatprep.subr.mxu0 0.0
    %389 = vmatpush1.msra.mxu0 0.0
    %390 = vmatprep.subr.mxu0 0.0
    %391 = vmatpush1.msra.mxu0 0.0
    %392 = vmatprep.subr.mxu0 0.0
    %393 = vmatpush1.msra.mxu0 0.0
    %394 = vmatprep.subr.mxu0 0.0
    %395 = vmatpush1.msra.mxu0 0.0
    %396 = vmatprep.subr.mxu0 0.0
    %397 = vmatpush1.msra.mxu0 0.0
    %398 = vmatprep.subr.mxu0 0.0
    %399 = vmatpush1.msra.mxu0 0.0
    %400 = vmatprep.subr.mxu0 0.0
    %401 = vmatpush1.msra.mxu0 0.0
    %402 = vmatprep.subr.mxu0 0.0
    %403 = vmatpush1.msra.mxu0 0.0
    %404 = vmatprep.subr.mxu0 0.0
    %405 = vmatpush1.msra.mxu0 0.0
    %406 = vmatprep.subr.mxu0 0.0
    %407 = vmatpush1.msra.mxu0 0.0
    %408 = vmatprep.subr.mxu0 0.0
    %409 = vmatpush1.msra.mxu0 0.0
    %410 = vmatprep.subr.mxu0 0.0
    %411 = vmatpush1.msra.mxu0 0.0
    %412 = vmatprep.subr.mxu0 0.0
    %413 = vmatpush1.msra.mxu0 0.0
    %414 = vmatprep.subr.mxu0 0.0
    %415 = vmatpush1.msra.mxu0 0.0
    %416 = vmatprep.subr.mxu0 0.0
    %417 = vmatpush1.msra.mxu0 0.0
    %418 = vmatprep.subr.mxu0 0.0
    %419 = vmatpush1.msra.mxu0 0.0
    %420 = vmatprep.subr.mxu0 0.0
    %421 = vmatpush1.msra.mxu0 0.0
    %422 = vmatprep.subr.mxu0 0.0
    %423 = vmatpush1.msra.mxu0 0.0
    %424 = vmatprep.subr.mxu0 0.0
    %425 = vmatpush1.msra.mxu0 0.0
    %426 = vmatprep.subr.mxu0 0.0
    %427 = vmatpush1.msra.mxu0 0.0
    %428 = vmatprep.subr.mxu0 0.0
    %429 = vmatpush1.msra.mxu0 0.0
    %430 = vmatprep.mubr.f32.mxu0 0.0
    %431 = vmatmul.mubr.f32.gmra.mrb[0].mxu0 %v154
    %v432 = vpop.f32.mrb[0].mxu0
    %v433 = vadd.f32 %v363, %v432
    %v434 = vpop.f32.mrb[0].mxu0
    %435 = vdwg.mxu0
    %vm436 = vcmask 74752
    %437 = vst.msk [vmem:[#allocation2] sm:$0x3] %vm436, %v433
    // Predicated region
    $region10: #{tpu_custom_call.1} parent=1 // pred_check
      _
    $region11: #{tpu_custom_call.1} parent=1 // pred_check_branch
      %439 = sbr.rel (0) target = $region13
    $region12: #{tpu_custom_call.1} parent=1 // pred_region
      %s441 = ssub.s32 32, 32
      %442 = vsyncadd [#allocation3], %s441
      %s444 = sshll.u32 [#allocation2], 4
      %s445 = int_to_ptr.vmem [resolvable:$true] %s444
      %447 = dma.vmem_to_hbm [thread:$0]  %s445, 32, %s2, [#allocation3]
    $region13: #{tpu_custom_call.1} parent=1 // pred_fallthru
      _
    // Predicated region
    $region14: #{tpu_custom_call.1} parent=1 // pred_check
      _
    $region15: #{tpu_custom_call.1} parent=1 // pred_check_branch
      %449 = sbr.rel (0) target = $region17
    $region16: #{tpu_custom_call.1} parent=1 // pred_region
      %450 = dma.done [#allocation3], 32
    $region17: #{tpu_custom_call.1} parent=1 // pred_fallthru
      _
    %451 = vsyncpa [#allocation3], 1

</llo_original>
